<compile_context>
chip_gen: v7x
topology: tpu7x:2x2x1
jax: 0.10.0
libtpu: 0.0.40
codegen_flags: <defaults>
</compile_context>

<pallas_src>
import jax
import jax.numpy as jnp
from jax.experimental import pallas as pl
from jax.experimental.pallas import tpu as pltpu

EPS = 1e-12  # F.normalize default eps


def _rmsnorm_kernel(x_ref, g_ref, o_ref):
    """x_ref: (TB, C, TL); g_ref: (1, C, 1) pre-scaled by sqrt(C); o_ref: (TB, C, TL)."""
    x = x_ref[...].astype(jnp.float32)                    # (TB, C, TL)
    ss = jnp.sum(x * x, axis=1, keepdims=True)            # (TB, 1, TL) sublane reduce
    inv = jax.lax.rsqrt(jnp.maximum(ss, EPS * EPS))       # == 1 / max(||x||_2, EPS); EUP slot
    o_ref[...] = (x * inv * g_ref[...]).astype(o_ref.dtype)


def _vmem_limit_bytes():
    """Generation-aware scoped-VMEM limit: ~3/4 of per-core VMEM, clamped to [32, 96] MiB."""
    try:
        cap = int(pltpu.get_tpu_info().vmem_capacity_bytes)
    except Exception:
        cap = 64 * 1024 * 1024  # conservative fallback: v7x per-TensorCore VMEM
    return int(max(32 * 1024 * 1024, min(cap * 3 // 4, 96 * 1024 * 1024)))


def _pick_tiles(B, C, L, itemsize, block_budget):
    """Pick (TB, TL) so each input block is close to `block_budget` bytes.
    TL is a multiple of 128 unless it covers the whole L axis; TB > 1 only when
    one batch row (full C x L) is small, and is kept an exact divisor of B."""
    row_bytes = C * L * itemsize
    if row_bytes <= block_budget:
        TL = L  # whole L axis in one tile (full-dim block is always legal)
        TB = max(1, min(B, block_budget // max(row_bytes, 1)))
        while B % TB:          # keep the leading block even; B is small, loop is cheap
            TB -= 1
    else:
        TB = 1
        per128 = C * 128 * itemsize
        TL = max(128, (block_budget // per128) * 128)
    return TB, TL


def rmsnorm_forward(x, g, *, l_tile=None, b_tile=None):
    """x: (B, C, L); g: (1, C, 1). Returns F.normalize(x, dim=1) * g * sqrt(C)."""
    B, C, L = x.shape
    itemsize = jnp.dtype(x.dtype).itemsize

    # Fold the constant sqrt(C) scale into the gain in the wrapper (exact).
    g_scaled = (g.astype(jnp.float32) * (C ** 0.5)).reshape(1, C, 1)

    vmem_limit = _vmem_limit_bytes()
    block_budget = min(4 * 1024 * 1024, vmem_limit // 6)  # ~1-4 MiB/block, 2x(in+out) buffered
    TB, TL = _pick_tiles(B, C, L, itemsize, block_budget)
    if l_tile is not None:
        TL = l_tile
        TB = b_tile if b_tile is not None else 1
    elif b_tile is not None:
        TB = b_tile

    nb, nl = pl.cdiv(B, TB), pl.cdiv(L, TL)
    # Larger parallel axis first -> balanced sharding across v7x's two TCs.
    if nl >= nb:
        grid = (nl, nb)
        xo_map = lambda l, b: (b, 0, l)
    else:
        grid = (nb, nl)
        xo_map = lambda b, l: (b, 0, l)
    g_map = lambda i, j: (0, 0, 0)  # constant -> gain DMA'd once, VMEM-resident

    cost = pl.CostEstimate(
        flops=5 * B * C * L,
        transcendentals=B * L,
        bytes_accessed=2 * B * C * L * itemsize + C * 4,
    )

    out = pl.pallas_call(
        _rmsnorm_kernel,
        out_shape=jax.ShapeDtypeStruct((B, C, L), x.dtype),
        grid_spec=pltpu.PrefetchScalarGridSpec(
            num_scalar_prefetch=0,
            grid=grid,
            in_specs=[
                # activation tile: pipelined / double-buffered by Pallas;
                # ragged last block along B or L handled by OOB masking.
                pl.BlockSpec((TB, C, TL), xo_map),
                # gain: constant index_map -> resident across all grid steps
                pl.BlockSpec((1, C, 1), g_map),
            ],
            out_specs=pl.BlockSpec((TB, C, TL), xo_map),
        ),
        compiler_params=pltpu.CompilerParams(
            dimension_semantics=("parallel", "parallel"),
            vmem_limit_bytes=vmem_limit,
        ),
        cost_estimate=cost,
    )(x, g_scaled)
    return out


def rmsnorm_reference(x, g):
    """Pure-JAX reference mirroring F.normalize(x, dim=1) * g * sqrt(C)."""
    xf = x.astype(jnp.float32)
    C = x.shape[1]
    nrm = jnp.sqrt(jnp.sum(xf * xf, axis=1, keepdims=True))
    y = xf / jnp.maximum(nrm, EPS) * g.astype(jnp.float32) * (C ** 0.5)
    return y.astype(x.dtype)


if __name__ == "__main__":
    key = jax.random.PRNGKey(0)
    kx, kg, kx2 = jax.random.split(key, 3)

    # Small shapes consistent with the module: x (B, C, L), g (1, C, 1).
    B, C, L = 2, 4, 16
    x = jax.random.normal(kx, (B, C, L), jnp.float32)
    g = 1.0 + 0.1 * jax.random.normal(kg, (1, C, 1), jnp.float32)

    out = jax.block_until_ready(rmsnorm_forward(x, g))
    ref = jax.block_until_ready(rmsnorm_reference(x, g))
    assert out.shape == (B, C, L)
    assert not bool(jnp.any(jnp.isnan(out))), "NaN in output (small)"
    assert jnp.allclose(out, ref, atol=1e-5, rtol=1e-5), "mismatch vs reference (small)"

    # Ragged-L path: L % TL != 0, no explicit pad/slice — relies on grid OOB masking.
    B2, C2, L2 = 2, 8, 300
    x2 = jax.random.normal(kx2, (B2, C2, L2), jnp.float32)
    g2 = jnp.ones((1, C2, 1), jnp.float32)
    out2 = jax.block_until_ready(rmsnorm_forward(x2, g2, l_tile=128))
    ref2 = rmsnorm_reference(x2, g2)
    assert out2.shape == (B2, C2, L2)
    assert not bool(jnp.any(jnp.isnan(out2))), "NaN in output (ragged L)"
    assert jnp.allclose(out2, ref2, atol=1e-5, rtol=1e-5), "mismatch vs reference (ragged L)"

    # Auto-tiling path (batch packing for small C*L).
    out3 = jax.block_until_ready(rmsnorm_forward(x2, g2))
    assert jnp.allclose(out3, ref2, atol=1e-5, rtol=1e-5), "mismatch vs reference (auto tiles)"

    print("KERNEL_OK")
</pallas_src>

<mosaic_0001>
module attributes {stable_mosaic.version = 11 : i64} {
  func.func @_rmsnorm_kernel(%arg0: i32, %arg1: i32, %arg2: memref<2x4x16xf32, #tpu.memory_space<vmem>>, %arg3: memref<1x4x1xf32, #tpu.memory_space<vmem>>, %arg4: memref<2x4x16xf32, #tpu.memory_space<vmem>>) attributes {dimension_semantics = [#tpu.dimension_semantics<parallel>, #tpu.dimension_semantics<parallel>], iteration_bounds = array<i64: 1, 1>, scalar_prefetch = 0 : i64, scratch_operands = 0 : i64, tpu.core_type = #tpu.core_type<tc>, window_params = [{transform_indices = @transform_0, window_bounds = array<i64: 2, 4, 16>}, {pipeline_mode = #tpu.pipeline_mode<synchronous>, transform_indices = @transform_1, window_bounds = array<i64: 1, 4, 1>}, {transform_indices = @transform_2, window_bounds = array<i64: 2, 4, 16>}]} {
    %c0 = arith.constant 0 : index
    %c0_0 = arith.constant 0 : index
    %c0_1 = arith.constant 0 : index
    %0 = vector.load %arg2[%c0, %c0_0, %c0_1] : memref<2x4x16xf32, #tpu.memory_space<vmem>>, vector<2x4x16xf32>
    %1 = arith.mulf %0, %0 : vector<2x4x16xf32>
    %cst = arith.constant dense<0.000000e+00> : vector<2x16xf32>
    %2 = vector.multi_reduction <add>, %1, %cst [1] : vector<2x4x16xf32> to vector<2x16xf32>
    %3 = vector.shape_cast %2 : vector<2x16xf32> to vector<2x1x16xf32>
    %cst_2 = arith.constant 1.000000e-24 : f32
    %4 = vector.broadcast %cst_2 : f32 to vector<2x1x16xf32>
    %5 = arith.maximumf %3, %4 : vector<2x1x16xf32>
    %6 = math.rsqrt %5 : vector<2x1x16xf32>
    %7 = vector.broadcast %6 : vector<2x1x16xf32> to vector<2x4x16xf32>
    %8 = arith.mulf %0, %7 : vector<2x4x16xf32>
    %c0_3 = arith.constant 0 : index
    %c0_4 = arith.constant 0 : index
    %c0_5 = arith.constant 0 : index
    %9 = vector.load %arg3[%c0_3, %c0_4, %c0_5] : memref<1x4x1xf32, #tpu.memory_space<vmem>>, vector<1x4x1xf32>
    %10 = vector.broadcast %9 : vector<1x4x1xf32> to vector<2x4x16xf32>
    %11 = arith.mulf %8, %10 : vector<2x4x16xf32>
    %c0_6 = arith.constant 0 : index
    %c0_7 = arith.constant 0 : index
    %c0_8 = arith.constant 0 : index
    %12 = vector.load %arg4[%c0_6, %c0_7, %c0_8] : memref<2x4x16xf32, #tpu.memory_space<vmem>>, vector<2x4x16xf32>
    tpu.vector_store %arg4[%c0_6, %c0_7, %c0_8], %11 {strides = array<i32>} : memref<2x4x16xf32, #tpu.memory_space<vmem>>, vector<2x4x16xf32>,
    return
  }
  func.func @transform_0(%arg0: i32, %arg1: i32) -> (i32, i32, i32) {
    %c0_i32 = arith.constant 0 : i32
    %c0_i32_0 = arith.constant 0 : i32
    return %arg1, %c0_i32, %arg0 : i32, i32, i32
  }
  func.func @transform_1(%arg0: i32, %arg1: i32) -> (i32, i32, i32) {
    %c0_i32 = arith.constant 0 : i32
    %c0_i32_0 = arith.constant 0 : i32
    %c0_i32_1 = arith.constant 0 : i32
    %c0_i32_2 = arith.constant 0 : i32
    return %c0_i32, %c0_i32_0, %c0_i32_1 : i32, i32, i32
  }
  func.func @transform_2(%arg0: i32, %arg1: i32) -> (i32, i32, i32) {
    %c0_i32 = arith.constant 0 : i32
    %c0_i32_0 = arith.constant 0 : i32
    return %arg1, %c0_i32, %arg0 : i32, i32, i32
  }
}

</mosaic_0001>

<llo_original>
// kernel: tpu_custom_call.1
$region0: #{tpu_custom_call.1}
  #allocation0 [shape = 'u32[]', space=smem, size = 0x4, offset = 0x4, fixed_abs, tag = 'smem constant byte address 0x4 - core index']
  #allocation1 [shape = 'u32[144,128]{1,0:T(1,128)}', space=vmem, size = 0x12000, scoped, tag = 'internal scratch']
  %s0 = inlined_call_operand.hbm [shape: f32[2,4,16], index: 0, kind: input, shape index: {}]
  %s1 = inlined_call_operand.vmem [shape: f32[1,4,1], index: 1, kind: input, shape index: {}]
  %s2 = inlined_call_operand.hbm [shape: f32[2,4,16], index: 2, kind: output, shape index: {}]
  %s3 = sld [smem:[#allocation0]]
  $region22: #{tpu_custom_call.1} parent=0
    _
  %s5 = ssub.s32 1, %s3
  %s6 = scalar_select 0, %s5, %s3
  $region1: #{tpu_custom_call.1} parent=0
    #allocation2 [shape = 'u8[4096]{0}', space=vmem, size = 0x1000, scoped, tag = 'input window, operand 0, single buffered']
    #allocation3 [shape = 's32[1]{0}', space=sflag, size = 0x4, scoped, tag = 'scoped memory for tpu_custom_call.1']
    #allocation4 [shape = 's32[1]{0}', space=sflag, size = 0x4, scoped, tag = 'scoped memory for tpu_custom_call.1']
    #allocation5 [shape = 'u8[4096]{0}', space=vmem, size = 0x1000, scoped, tag = 'output window, operand 0, single buffered']
    %7 = vsyncpa [#allocation3], 0
    %8 = vsyncpa [#allocation4], 0
    // Predicated region
    $region2: #{tpu_custom_call.1} parent=1 // pred_check
      _
    $region3: #{tpu_custom_call.1} parent=1 // pred_check_branch
      %10 = sbr.rel (0) target = $region5
    $region4: #{tpu_custom_call.1} parent=1 // pred_region
      %s12 = ssub.s32 128, 128
      %13 = vsyncadd [#allocation3], %s12
      %s14 = sshll.u32 [#allocation2], 4
      %s15 = int_to_ptr.vmem [resolvable:$true] %s14
      %20 = dma.hbm_to_vmem [thread:$0]  %s0, 128, %s15, [#allocation3], 64, 64, 4
    $region5: #{tpu_custom_call.1} parent=1 // pred_fallthru
      _
    // Predicated region
    $region6: #{tpu_custom_call.1} parent=1 // pred_check
      _
    $region7: #{tpu_custom_call.1} parent=1 // pred_check_branch
      %22 = sbr.rel (0) target = $region9
    $region8: #{tpu_custom_call.1} parent=1 // pred_region
      _
    $region9: #{tpu_custom_call.1} parent=1 // pred_fallthru
      _
    // Predicated region
    $region10: #{tpu_custom_call.1} parent=1 // pred_check
      _
    $region11: #{tpu_custom_call.1} parent=1 // pred_check_branch
      %24 = sbr.rel (0) target = $region13
    $region12: #{tpu_custom_call.1} parent=1 // pred_region
      %25 = dma.done [#allocation3], 128
    $region13: #{tpu_custom_call.1} parent=1 // pred_fallthru
      _
    %v26 = vld [vmem:[#allocation2] sm:$0xf]
    %v27 = vld [vmem:[#allocation2 + $0x4] sm:$0xf]
    %v28 = vmul.f32 %v26, %v26
    %v29 = vmul.f32 %v27, %v27
    %vm30 = vcmask 125952
    %v31 = vsel %vm30, %v28, 0.0
    %v32 = vrot.slane %v31, 4
    %v33 = vadd.f32 %v31, %v32
    %v34 = vrot.slane %v33, 2
    %v35 = vadd.f32 %v33, %v34
    %v36 = vrot.slane %v35, 1
    %v37 = vadd.f32 %v35, %v36
    %v38 = vsel %vm30, %v29, 0.0
    %v39 = vrot.slane %v38, 4
    %v40 = vadd.f32 %v38, %v39
    %v41 = vrot.slane %v40, 2
    %v42 = vadd.f32 %v40, %v41
    %v43 = vrot.slane %v42, 1
    %v44 = vadd.f32 %v42, %v43
    %v45 = vmax.f32 %v37, 1e-24
    %v46 = vmax.f32 %v44, 1e-24
    %v47 = vrsqrt.pop %v45
    %v48 = vrsqrt.pop %v46
    %v49 = vmul.f32 %v26, %v47
    %v50 = vmul.f32 %v27, %v48
    %v51 = vld [vmem:[%s1] sm:$0xf]
    %53 = vset.pattern.permute.xlu0 0
    %54 = vperm.xlu0 %53, %v51
    %v55 = vpop.permute.xlu0 %54
    %v57 = vmul.f32 %v49, %v55
    %v58 = vmul.f32 %v50, %v55
    %59 = vst.msk [vmem:[#allocation5] sm:$0xf] %vm30, %v57
    %60 = vst.msk [vmem:[#allocation5 + $0x4] sm:$0xf] %vm30, %v58
    // Predicated region
    $region14: #{tpu_custom_call.1} parent=1 // pred_check
      _
    $region15: #{tpu_custom_call.1} parent=1 // pred_check_branch
      %62 = sbr.rel (0) target = $region17
    $region16: #{tpu_custom_call.1} parent=1 // pred_region
      %s64 = ssub.s32 128, 128
      %65 = vsyncadd [#allocation4], %s64
      %s66 = sshll.u32 [#allocation5], 4
      %s67 = int_to_ptr.vmem [resolvable:$true] %s66
      %72 = dma.vmem_to_hbm [thread:$0]  %s67, 128, %s2, [#allocation4], 64, 64, 4
    $region17: #{tpu_custom_call.1} parent=1 // pred_fallthru
      _
    // Predicated region
    $region18: #{tpu_custom_call.1} parent=1 // pred_check
      _
    $region19: #{tpu_custom_call.1} parent=1 // pred_check_branch
      %74 = sbr.rel (0) target = $region21
    $region20: #{tpu_custom_call.1} parent=1 // pred_region
      %75 = dma.done [#allocation4], 128
    $region21: #{tpu_custom_call.1} parent=1 // pred_fallthru
      _
    %76 = vsyncpa [#allocation3], 1
    %77 = vsyncpa [#allocation4], 1

</llo_original>
